<compile_context>
chip_gen: v7x
topology: tpu7x:2x2x1
jax: 0.10.0
libtpu: 0.0.40
codegen_flags: <defaults>
</compile_context>

<pallas_src>
import jax
import jax.numpy as jnp
from jax.experimental import pallas as pl
from jax.experimental.pallas import tpu as pltpu

_EPS = 1e-6  # nn.LayerNorm(eps=1e-06) in the module


def _proj_head_kernel(x_ref, g_ref, b_ref, w_ref, o_ref, y_ref):
    j = pl.program_id(1)

    # LayerNorm + affine once per batch tile.  j is the innermost ("arbitrary")
    # grid axis, so the normalized tile cached in VMEM scratch is reused for
    # every output-column tile of this batch tile.
    @pl.when(j == 0)
    def _():
        x = x_ref[...].astype(jnp.float32)
        mean = jnp.mean(x, axis=-1, keepdims=True)
        xc = x - mean
        var = jnp.mean(xc * xc, axis=-1, keepdims=True)   # biased var, as nn.LayerNorm
        xn = xc * jax.lax.rsqrt(var + _EPS)               # EUP rsqrt (free slot)
        y = xn * g_ref[...].astype(jnp.float32) + b_ref[...].astype(jnp.float32)
        y_ref[...] = y.astype(y_ref.dtype)

    # Projection, no bias: (bm, D) @ (D, bn) on the MXU, f32 accumulation.
    # Operands in y_ref.dtype (bf16 by default -> native MXU pass).
    o_ref[...] = jnp.dot(
        y_ref[...],
        w_ref[...].astype(y_ref.dtype),
        preferred_element_type=jnp.float32,
    ).astype(o_ref.dtype)


def _round_up(v, m):
    return ((v + m - 1) // m) * m


def contrastive_projection_head(x, gamma, beta, w, *, bm=None, bn=None,
                                mxu_dtype=jnp.bfloat16):
    """x: (B, D); gamma, beta: (D,); w: (D, K) (== PyTorch Linear weight transposed)."""
    B, D = x.shape
    Dw, K = w.shape
    assert Dw == D and gamma.shape == (D,) and beta.shape == (D,)

    x_item = jnp.dtype(x.dtype).itemsize
    w_item = jnp.dtype(w.dtype).itemsize
    out_item = x_item
    y_item = jnp.dtype(mxu_dtype).itemsize

    # Output-column (lane) tile: keep the whole weight resident (single j tile,
    # one weight DMA) whenever it is cheap; otherwise tile lane-dense.
    if bn is None:
        if K % 128 != 0 or D * K * w_item <= 8 * 1024 * 1024:
            bn = K
        else:
            bn = min(512, K)

    bm_default = bm is None
    if bm_default:
        bm = min(512, _round_up(B, 8))

    # Per-generation VMEM budget: ~75% of physical per-TensorCore VMEM
    # (v7x: 64 MiB -> 48 MiB cap; v5e/v6e: 128 MiB -> 96 MiB).
    try:
        vmem_phys = pltpu.get_tpu_info().vmem_capacity_bytes
    except Exception:  # conservative fallback = v7x
        vmem_phys = 64 * 1024 * 1024
    vmem_cap = int((vmem_phys * 3) // 4)

    def vmem_use(bm_, bn_):
        return (2 * bm_ * D * x_item      # x tile (double-buffered)
                + 2 * D * bn_ * w_item    # weight tile (double-buffered)
                + 2 * bm_ * bn_ * out_item  # output tile (double-buffered)
                + 2 * 2 * D * 4           # gamma / beta (resident)
                + bm_ * D * y_item        # cached y scratch
                + 3 * bm_ * D * 4)        # f32 LayerNorm intermediates headroom

    while vmem_use(bm, bn) > vmem_cap and bm > 8:
        bm = max(8, _round_up(bm // 2, 8))

    # v7x megacore: make sure the 'parallel' batch axis has >= 2 tiles so both
    # TensorCores get work (harmless on single-TC v5e/v6e).
    if bm_default and B > 16 and pl.cdiv(B, bm) < 2:
        bm = max(8, _round_up(pl.cdiv(B, 2), 8))

    grid = (pl.cdiv(B, bm), pl.cdiv(K, bn))
    num_i, num_j = grid

    # Advisory cost estimate (weight is re-streamed per batch tile only when
    # there are multiple output-column tiles; LN rsqrt happens once per row).
    weight_passes = num_i if num_j > 1 else 1
    cost = pl.CostEstimate(
        flops=2 * B * D * K + 8 * B * D,
        transcendentals=B,
        bytes_accessed=(B * D * x_item
                        + weight_passes * D * K * w_item
                        + 2 * D * 4
                        + B * K * out_item),
    )

    out = pl.pallas_call(
        _proj_head_kernel,
        out_shape=jax.ShapeDtypeStruct((B, K), x.dtype),
        grid=grid,
        in_specs=[
            pl.BlockSpec((bm, D), lambda i, j: (i, 0)),   # x: one DMA per batch tile
            pl.BlockSpec((1, D), lambda i, j: (0, 0)),    # gamma: VMEM-resident
            pl.BlockSpec((1, D), lambda i, j: (0, 0)),    # beta:  VMEM-resident
            pl.BlockSpec((D, bn), lambda i, j: (0, j)),   # weight column tiles
        ],
        out_specs=pl.BlockSpec((bm, bn), lambda i, j: (i, j)),
        scratch_shapes=[pltpu.VMEM((bm, D), mxu_dtype)],  # cached LayerNorm output
        compiler_params=pltpu.CompilerParams(
            # j carries the cached y tile across steps -> must NOT be
            # megacore-sharded; i is safely parallel.
            dimension_semantics=("parallel", "arbitrary"),
            vmem_limit_bytes=vmem_cap,
        ),
        cost_estimate=cost,
    )(x, gamma.reshape(1, D), beta.reshape(1, D), w)

    return out


def reference(x, gamma, beta, w, eps=_EPS):
    x = x.astype(jnp.float32)
    mean = jnp.mean(x, axis=-1, keepdims=True)
    xc = x - mean
    var = jnp.mean(xc * xc, axis=-1, keepdims=True)
    xn = xc / jnp.sqrt(var + eps)
    y = xn * gamma + beta
    return jnp.dot(y, w, precision=jax.lax.Precision.HIGHEST)


if __name__ == "__main__":
    key = jax.random.PRNGKey(0)
    kx, kg, kb, kw = jax.random.split(key, 4)

    # Small module-consistent shapes: batch B=4, dim_in=64, dim_out=32.
    B, dim_in, dim_out = 4, 64, 32
    x = jax.random.normal(kx, (B, dim_in), dtype=jnp.float32)
    gamma = 1.0 + 0.1 * jax.random.normal(kg, (dim_in,), dtype=jnp.float32)
    beta = 0.1 * jax.random.normal(kb, (dim_in,), dtype=jnp.float32)
    # PyTorch Linear weight is (dim_out, dim_in); the kernel takes its transpose.
    w_t = 0.1 * jax.random.normal(kw, (dim_in, dim_out), dtype=jnp.float32)

    ref = reference(x, gamma, beta, w_t)

    # Default (bf16 MXU) path — tolerance reflects bf16 matmul operands with
    # f32 accumulation vs the fp32 HIGHEST-precision reference.
    out = jax.block_until_ready(contrastive_projection_head(x, gamma, beta, w_t))
    assert out.shape == (B, dim_out)
    assert jnp.allclose(out, ref, atol=2e-2, rtol=2e-2), (out, ref)

    # Precise (f32 MXU) path.
    out_f32 = jax.block_until_ready(
        contrastive_projection_head(x, gamma, beta, w_t, mxu_dtype=jnp.float32))
    assert jnp.allclose(out_f32, ref, atol=1e-2, rtol=1e-2), (out_f32, ref)

    # bf16-input path (halves x HBM traffic; f32 LayerNorm math in-register).
    out_bf = jax.block_until_ready(
        contrastive_projection_head(x.astype(jnp.bfloat16), gamma, beta, w_t))
    ref_bf = reference(x.astype(jnp.bfloat16), gamma, beta, w_t)
    assert jnp.allclose(out_bf.astype(jnp.float32), ref_bf, atol=5e-2, rtol=5e-2)

    # Exercise ragged batch tiles + multiple output-column tiles (scratch reuse
    # across j, weight streaming, partial last batch block).
    kx2, kg2, kb2, kw2 = jax.random.split(jax.random.PRNGKey(1), 4)
    B2, D2, K2 = 100, 128, 256
    x2 = jax.random.normal(kx2, (B2, D2), dtype=jnp.float32)
    g2 = 1.0 + 0.1 * jax.random.normal(kg2, (D2,), dtype=jnp.float32)
    b2 = 0.1 * jax.random.normal(kb2, (D2,), dtype=jnp.float32)
    w2 = 0.1 * jax.random.normal(kw2, (D2, K2), dtype=jnp.float32)
    out2 = jax.block_until_ready(
        contrastive_projection_head(x2, g2, b2, w2, bn=128))
    ref2 = reference(x2, g2, b2, w2)
    assert out2.shape == (B2, K2)
    assert jnp.allclose(out2, ref2, atol=2e-2, rtol=2e-2)

    # TODO(synk): use_MLP=True branch (LayerNorm -> GELU Mlp projection) not
    # implemented; this covers the default Linear(dim_in, dim_out, bias=False) path.
    print("KERNEL_OK")
</pallas_src>

<mosaic_0001>
module attributes {stable_mosaic.version = 11 : i64} {
  func.func @_proj_head_kernel(%arg0: i32, %arg1: i32, %arg2: memref<8x64xf32, #tpu.memory_space<vmem>>, %arg3: memref<1x64xf32, #tpu.memory_space<vmem>>, %arg4: memref<1x64xf32, #tpu.memory_space<vmem>>, %arg5: memref<64x32xf32, #tpu.memory_space<vmem>>, %arg6: memref<8x32xf32, #tpu.memory_space<vmem>>, %arg7: memref<8x64xbf16, #tpu.memory_space<vmem>>) attributes {dimension_semantics = [#tpu.dimension_semantics<parallel>, #tpu.dimension_semantics<arbitrary>], iteration_bounds = array<i64: 1, 1>, scalar_prefetch = 0 : i64, scratch_operands = 1 : i64, tpu.core_type = #tpu.core_type<tc>, window_params = [{transform_indices = @transform_0, window_bounds = array<i64: 8, 64>}, {pipeline_mode = #tpu.pipeline_mode<synchronous>, transform_indices = @transform_1, window_bounds = array<i64: 1, 64>}, {pipeline_mode = #tpu.pipeline_mode<synchronous>, transform_indices = @transform_2, window_bounds = array<i64: 1, 64>}, {transform_indices = @transform_3, window_bounds = array<i64: 64, 32>}, {transform_indices = @transform_4, window_bounds = array<i64: 8, 32>}]} {
    %c0_i32 = arith.constant 0 : i32
    %0 = arith.cmpi eq, %arg1, %c0_i32 : i32
    %1 = arith.extui %0 : i1 to i32
    %c0_i32_0 = arith.constant 0 : i32
    %2 = arith.cmpi ne, %1, %c0_i32_0 : i32
    scf.if %2 {
      %c0_6 = arith.constant 0 : index
      %c0_7 = arith.constant 0 : index
      %8 = vector.load %arg2[%c0_6, %c0_7] : memref<8x64xf32, #tpu.memory_space<vmem>>, vector<8x64xf32>
      %cst_8 = arith.constant dense<0.000000e+00> : vector<8xf32>
      %9 = vector.multi_reduction <add>, %8, %cst_8 [1] : vector<8x64xf32> to vector<8xf32>
      %10 = vector.shape_cast %9 : vector<8xf32> to vector<8x1xf32>
      %cst_9 = arith.constant 6.400000e+01 : f32
      %11 = vector.broadcast %cst_9 : f32 to vector<8x1xf32>
      %12 = arith.divf %10, %11 : vector<8x1xf32>
      %13 = vector.broadcast %12 : vector<8x1xf32> to vector<8x64xf32>
      %14 = arith.subf %8, %13 : vector<8x64xf32>
      %15 = arith.mulf %14, %14 : vector<8x64xf32>
      %cst_10 = arith.constant dense<0.000000e+00> : vector<8xf32>
      %16 = vector.multi_reduction <add>, %15, %cst_10 [1] : vector<8x64xf32> to vector<8xf32>
      %17 = vector.shape_cast %16 : vector<8xf32> to vector<8x1xf32>
      %cst_11 = arith.constant 6.400000e+01 : f32
      %18 = vector.broadcast %cst_11 : f32 to vector<8x1xf32>
      %19 = arith.divf %17, %18 : vector<8x1xf32>
      %cst_12 = arith.constant 9.99999997E-7 : f32
      %20 = vector.broadcast %cst_12 : f32 to vector<8x1xf32>
      %21 = arith.addf %19, %20 : vector<8x1xf32>
      %22 = math.rsqrt %21 : vector<8x1xf32>
      %23 = vector.broadcast %22 : vector<8x1xf32> to vector<8x64xf32>
      %24 = arith.mulf %14, %23 : vector<8x64xf32>
      %c0_13 = arith.constant 0 : index
      %c0_14 = arith.constant 0 : index
      %25 = vector.load %arg3[%c0_13, %c0_14] : memref<1x64xf32, #tpu.memory_space<vmem>>, vector<1x64xf32>
      %26 = vector.broadcast %25 : vector<1x64xf32> to vector<8x64xf32>
      %27 = arith.mulf %24, %26 : vector<8x64xf32>
      %c0_15 = arith.constant 0 : index
      %c0_16 = arith.constant 0 : index
      %28 = vector.load %arg4[%c0_15, %c0_16] : memref<1x64xf32, #tpu.memory_space<vmem>>, vector<1x64xf32>
      %29 = vector.broadcast %28 : vector<1x64xf32> to vector<8x64xf32>
      %30 = arith.addf %27, %29 : vector<8x64xf32>
      %31 = arith.truncf %30 : vector<8x64xf32> to vector<8x64xbf16>
      %c0_17 = arith.constant 0 : index
      %c0_18 = arith.constant 0 : index
      %32 = vector.load %arg7[%c0_17, %c0_18] : memref<8x64xbf16, #tpu.memory_space<vmem>>, vector<8x64xbf16>
      tpu.vector_store %arg7[%c0_17, %c0_18], %31 {strides = array<i32>} : memref<8x64xbf16, #tpu.memory_space<vmem>>, vector<8x64xbf16>,
    } else {
    }
    %c0 = arith.constant 0 : index
    %c0_1 = arith.constant 0 : index
    %3 = vector.load %arg7[%c0, %c0_1] : memref<8x64xbf16, #tpu.memory_space<vmem>>, vector<8x64xbf16>
    %c0_2 = arith.constant 0 : index
    %c0_3 = arith.constant 0 : index
    %4 = vector.load %arg5[%c0_2, %c0_3] : memref<64x32xf32, #tpu.memory_space<vmem>>, vector<64x32xf32>
    %5 = arith.truncf %4 : vector<64x32xf32> to vector<64x32xbf16>
    %cst = arith.constant dense<0.000000e+00> : vector<8x32xf32>
    %6 = tpu.matmul %3, %5, %cst {dimension_numbers = #tpu.dot_dimension_numbers<[1], [0], [0], [1], [0, 0, 1, 1], [], []>} : vector<8x64xbf16>, vector<64x32xbf16>, vector<8x32xf32> -> vector<8x32xf32>
    %c0_4 = arith.constant 0 : index
    %c0_5 = arith.constant 0 : index
    %7 = vector.load %arg6[%c0_4, %c0_5] : memref<8x32xf32, #tpu.memory_space<vmem>>, vector<8x32xf32>
    tpu.vector_store %arg6[%c0_4, %c0_5], %6 {strides = array<i32>} : memref<8x32xf32, #tpu.memory_space<vmem>>, vector<8x32xf32>,
    return
  }
  func.func @transform_0(%arg0: i32, %arg1: i32) -> (i32, i32) {
    %c0_i32 = arith.constant 0 : i32
    %c0_i32_0 = arith.constant 0 : i32
    return %arg0, %c0_i32 : i32, i32
  }
  func.func @transform_1(%arg0: i32, %arg1: i32) -> (i32, i32) {
    %c0_i32 = arith.constant 0 : i32
    %c0_i32_0 = arith.constant 0 : i32
    %c0_i32_1 = arith.constant 0 : i32
    return %c0_i32, %c0_i32_0 : i32, i32
  }
  func.func @transform_2(%arg0: i32, %arg1: i32) -> (i32, i32) {
    %c0_i32 = arith.constant 0 : i32
    %c0_i32_0 = arith.constant 0 : i32
    %c0_i32_1 = arith.constant 0 : i32
    return %c0_i32, %c0_i32_0 : i32, i32
  }
  func.func @transform_3(%arg0: i32, %arg1: i32) -> (i32, i32) {
    %c0_i32 = arith.constant 0 : i32
    %c0_i32_0 = arith.constant 0 : i32
    return %c0_i32, %arg1 : i32, i32
  }
  func.func @transform_4(%arg0: i32, %arg1: i32) -> (i32, i32) {
    %c0_i32 = arith.constant 0 : i32
    return %arg0, %arg1 : i32, i32
  }
}

</mosaic_0001>

<llo_original>
// kernel: tpu_custom_call.1
$region0: #{tpu_custom_call.1}
  #allocation0 [shape = 'u32[]', space=smem, size = 0x4, offset = 0x4, fixed_abs, tag = 'smem constant byte address 0x4 - core index']
  #allocation1 [shape = 'u32[144,128]{1,0:T(1,128)}', space=vmem, size = 0x12000, scoped, tag = 'internal scratch']
  #allocation2 [shape = 'bf16[8,64]{1,0:T(8,128)(2,1)}', space=vmem, size = 0x800, scoped, tag = 'scratch operand']
  %s0 = inlined_call_operand.vmem [shape: f32[4,64], index: 0, kind: input, shape index: {}]
  %s1 = inlined_call_operand.vmem [shape: f32[1,64], index: 1, kind: input, shape index: {}]
  %s2 = inlined_call_operand.vmem [shape: f32[1,64], index: 2, kind: input, shape index: {}]
  %s3 = inlined_call_operand.vmem [shape: f32[64,32], index: 3, kind: input, shape index: {}]
  %s4 = inlined_call_operand.hbm [shape: f32[4,32], index: 4, kind: output, shape index: {}]
  %s5 = sld [smem:[#allocation0]]
  $region30: #{tpu_custom_call.1} parent=0
    _
  %s7 = ssub.s32 1, %s5
  %s8 = scalar_select 0, %s7, %s5
  $region1: #{tpu_custom_call.1} parent=0
    #allocation3 [shape = 'u8[4096]{0}', space=vmem, size = 0x1000, scoped, tag = 'output window, operand 0, single buffered']
    #allocation4 [shape = 's32[1]{0}', space=sflag, size = 0x4, scoped, tag = 'scoped memory for tpu_custom_call.1']
    %9 = vsyncpa [#allocation4], 0
    // Predicated region
    $region2: #{tpu_custom_call.1} parent=1 // pred_check
      _
    $region3: #{tpu_custom_call.1} parent=1 // pred_check_branch
      %11 = sbr.rel (0) target = $region5
    $region4: #{tpu_custom_call.1} parent=1 // pred_region
      _
    $region5: #{tpu_custom_call.1} parent=1 // pred_fallthru
      _
    // Predicated region
    $region6: #{tpu_custom_call.1} parent=1 // pred_check
      _
    $region7: #{tpu_custom_call.1} parent=1 // pred_check_branch
      %13 = sbr.rel (0) target = $region9
    $region8: #{tpu_custom_call.1} parent=1 // pred_region
      _
    $region9: #{tpu_custom_call.1} parent=1 // pred_fallthru
      _
    // Predicated region
    $region10: #{tpu_custom_call.1} parent=1 // pred_check
      _
    $region11: #{tpu_custom_call.1} parent=1 // pred_check_branch
      %15 = sbr.rel (0) target = $region13
    $region12: #{tpu_custom_call.1} parent=1 // pred_region
      _
    $region13: #{tpu_custom_call.1} parent=1 // pred_fallthru
      _
    // Predicated region
    $region14: #{tpu_custom_call.1} parent=1 // pred_check
      _
    $region15: #{tpu_custom_call.1} parent=1 // pred_check_branch
      %17 = sbr.rel (0) target = $region17
    $region16: #{tpu_custom_call.1} parent=1 // pred_region
      _
    $region17: #{tpu_custom_call.1} parent=1 // pred_fallthru
      _
    %p19 = scmp.eq.s32.totalorder 0, 0
    // Predicated region
    $region18: #{tpu_custom_call.1} parent=1 // pred_check
      %p20 = pneg %p19
    $region19: #{tpu_custom_call.1} parent=1 // pred_check_branch
      %22 = sbr.rel (%p20) target = $region21
    $region20: #{tpu_custom_call.1} parent=1 // pred_region
      %v23 = vld [vmem:[%s0] sm:$0xff]
      %vm24 = vcmask 523264
      %v25 = vsel %vm24, %v23, 0.0
      %26 = vadd.xlane.f32.xlu0 %v25
      %v27 = vpop.xlane.xlu0 %26
      %v28 = vrcp.pop 64.0
      %v29 = vmul.f32 %v27, %v28
      %v30 = vsub.f32 %v23, %v29
      %v31 = vmul.f32 %v30, %v30
      %v32 = vsel %vm24, %v31, 0.0
      %33 = vadd.xlane.f32.xlu0 %v32
      %v34 = vpop.xlane.xlu0 %33
      %v35 = vmul.f32 %v34, %v28
      %v36 = vadd.f32 %v35, 1e-06
      %v37 = vrsqrt.pop %v36
      %v38 = vmul.f32 %v30, %v37
      %v39 = vld [vmem:[%s1] sm:$0x1]
      %v41 = vlaneseq
      %v42 = vshrl.u32 %v41, 7
      %v43 = vsub.s32 0, %v42
      %v44 = vrot.slane %v39, %v43
      %v46 = vmul.f32 %v38, %v44
      %v47 = vld [vmem:[%s2] sm:$0x1]
      %v49 = vlaneseq
      %v50 = vshrl.u32 %v49, 7
      %v51 = vsub.s32 0, %v50
      %v52 = vrot.slane %v47, %v51
      %v54 = vadd.f32 %v46, %v52
      %v55 = vpack.c.bf16 %v54, %v54
      %vm56 = vcmask 519168
      %57 = vst.msk [vmem:[#allocation2] sm:$0xf] %vm56, %v55
    $region21: #{tpu_custom_call.1} parent=1 // pred_fallthru
      _
    %v58 = vld [vmem:[#allocation2] sm:$0xf]
    %v59 = vld [vmem:[%s3] sm:$0xff]
    %v60 = vld [vmem:[%s3 + $0x8] sm:$0xff]
    %v61 = vld [vmem:[%s3 + $0x10] sm:$0xff]
    %v62 = vld [vmem:[%s3 + $0x18] sm:$0xff]
    %v63 = vld [vmem:[%s3 + $0x20] sm:$0xff]
    %v64 = vld [vmem:[%s3 + $0x28] sm:$0xff]
    %v65 = vld [vmem:[%s3 + $0x30] sm:$0xff]
    %v66 = vld [vmem:[%s3 + $0x38] sm:$0xff]
    %v67 = vpack.c.bf16 %v60, %v59
    %v68 = vpack.c.bf16 %v62, %v61
    %v69 = vpack.c.bf16 %v64, %v63
    %v70 = vpack.c.bf16 %v66, %v65
    %vm71 = vcmask 523264
    %v73 = vsel %vm71, %v58, 0
    %75 = vmatprep.subr.bf16.mxu0 0
    %76 = vmatpush1.bf16.msra.mxu0 %v67
    %77 = vmatprep.subr.bf16.mxu0 0
    %78 = vmatpush1.bf16.msra.mxu0 %v68
    %79 = vmatprep.subr.bf16.mxu0 0
    %80 = vmatpush1.bf16.msra.mxu0 %v69
    %81 = vmatprep.subr.bf16.mxu0 0
    %82 = vmatpush1.bf16.msra.mxu0 %v70
    %83 = vmatprep.subr.bf16.mxu0 0
    %84 = vmatpush1.bf16.msra.mxu0 0
    %85 = vmatprep.subr.bf16.mxu0 0
    %86 = vmatpush1.bf16.msra.mxu0 0
    %87 = vmatprep.subr.bf16.mxu0 0
    %88 = vmatpush1.bf16.msra.mxu0 0
    %89 = vmatprep.subr.bf16.mxu0 0
    %90 = vmatpush1.bf16.msra.mxu0 0
    %91 = vmatprep.subr.bf16.mxu0 0
    %92 = vmatpush1.bf16.msra.mxu0 0
    %93 = vmatprep.subr.bf16.mxu0 0
    %94 = vmatpush1.bf16.msra.mxu0 0
    %95 = vmatprep.subr.bf16.mxu0 0
    %96 = vmatpush1.bf16.msra.mxu0 0
    %97 = vmatprep.subr.bf16.mxu0 0
    %98 = vmatpush1.bf16.msra.mxu0 0
    %99 = vmatprep.subr.bf16.mxu0 0
    %100 = vmatpush1.bf16.msra.mxu0 0
    %101 = vmatprep.subr.bf16.mxu0 0
    %102 = vmatpush1.bf16.msra.mxu0 0
    %103 = vmatprep.subr.bf16.mxu0 0
    %104 = vmatpush1.bf16.msra.mxu0 0
    %105 = vmatprep.subr.bf16.mxu0 0
    %106 = vmatpush1.bf16.msra.mxu0 0
    %107 = vmatprep.mubr.bf16.mxu0 0
    %108 = vmatmul.mubr.bf16.gmra.mrb[0].mxu0 %v73
    %v109 = vpop.f32.mrb[0].mxu0
    %v110 = vadd.f32 0.0, %v109
    %v111 = vpop.f32.mrb[0].mxu0
    %v112 = vpop.f32.mrb[0].mxu0
    %v113 = vpop.f32.mrb[0].mxu0
    %114 = vdwg.mxu0
    %vm115 = vcmask 261120
    %116 = vst.msk [vmem:[#allocation3] sm:$0xff] %vm115, %v110
    // Predicated region
    $region22: #{tpu_custom_call.1} parent=1 // pred_check
      _
    $region23: #{tpu_custom_call.1} parent=1 // pred_check_branch
      %118 = sbr.rel (0) target = $region25
    $region24: #{tpu_custom_call.1} parent=1 // pred_region
      %s120 = ssub.s32 128, 64
      %121 = vsyncadd [#allocation4], %s120
      %s122 = sshll.u32 [#allocation3], 4
      %s123 = int_to_ptr.vmem [resolvable:$true] %s122
      %128 = dma.vmem_to_hbm [thread:$0]  %s123, 64, %s4, [#allocation4], 64, 64, 4
    $region25: #{tpu_custom_call.1} parent=1 // pred_fallthru
      _
    // Predicated region
    $region26: #{tpu_custom_call.1} parent=1 // pred_check
      _
    $region27: #{tpu_custom_call.1} parent=1 // pred_check_branch
      %130 = sbr.rel (0) target = $region29
    $region28: #{tpu_custom_call.1} parent=1 // pred_region
      %131 = dma.done [#allocation4], 128
    $region29: #{tpu_custom_call.1} parent=1 // pred_fallthru
      _
    %132 = vsyncpa [#allocation4], 1

</llo_original>
